<compile_context>
chip_gen: v7x
topology: tpu7x:2x2x1
jax: 0.10.0
libtpu: 0.0.40
codegen_flags: <defaults>
</compile_context>

<pallas_src>
import functools

import jax
import jax.numpy as jnp
from jax.experimental import pallas as pl
from jax.experimental.pallas import tpu as pltpu

_LANES = 128
_VMEM_LIMIT_BYTES = 32 * 1024 * 1024   # scoped-VMEM budget, safe on v5e / v6e / v7x
_TILE_BUDGET_BYTES = 8 * 1024 * 1024   # per-step pipeline-buffer budget (streaming)
_FUSED_SLAB_BYTES = 4 * 1024 * 1024    # max per-batch (C, HW) slab for the fused path


def _round_up(a, b):
    return (a + b - 1) // b * b


def _pick_tile(n_chan, itemsize, hw, n_bufs):
    """Largest 128-multiple spatial tile whose pipeline footprint
    (~n_bufs * C * tile * itemsize) fits the tile budget; capped at 2048 lanes.
    No exact-divisor requirement: the grid uses cdiv + in-kernel tail masking."""
    t = _TILE_BUDGET_BYTES // max(1, n_bufs * n_chan * itemsize)
    t = max(_LANES, min(t, 2048))
    t = (t // _LANES) * _LANES
    return min(t, _round_up(hw, _LANES))


def _conv_pad(k):
    return (k - 1) // 2


def _wide_len(n_chan, k):
    pad = _conv_pad(k)
    base = _round_up(pad, 8) if pad else 0
    return n_chan + 2 * base


def _channel_conv_sigmoid(w_ref, mean, wide_ref, *, n_chan, k):
    """sigmoid(Conv1d(1,1,k, zero-pad, no bias)(mean)) along the channel axis.

    mean:     (1, C, 1) f32 (channels on sublanes — the native layout of a lane
              reduction, and the layout the scale pass wants).
    wide_ref: (1, C + 2*base, 1) f32 VMEM scratch.  Shifting by +-pad channels is
    expressed as static sublane-offset slices of this zero-padded scratch; the
    out-of-range taps read the zero padding, matching PyTorch's zero padding.
    """
    pad = _conv_pad(k)
    base = _round_up(pad, 8) if pad else 0
    wide_ref[...] = jnp.zeros_like(wide_ref)
    wide_ref[:, base:base + n_chan, :] = mean
    y = jnp.zeros_like(mean)
    for t in range(k):                               # static unroll, k is tiny
        off = base - pad + t
        y = y + w_ref[t] * wide_ref[:, off:off + n_chan, :]
    return jax.nn.sigmoid(y)                         # (1, C, 1) f32


# --------------------------- fused single-pass path ---------------------------

def _eca_fused_kernel(w_ref, x_ref, o_ref, wide_ref, *, inv_hw, n_chan, k):
    # w_ref: (k,) f32 SMEM; x_ref/o_ref: (1, C, HW); wide_ref: f32 VMEM scratch.
    x = x_ref[...]
    mean = jnp.sum(x, axis=-1, keepdims=True, dtype=jnp.float32) * inv_hw   # (1,C,1)
    gate = _channel_conv_sigmoid(w_ref, mean, wide_ref, n_chan=n_chan, k=k)
    # Multiply in f32 (matches the reference), cast once to the output dtype.
    o_ref[...] = (x.astype(jnp.float32) * gate).astype(o_ref.dtype)


# --------------------------- two streaming passes -----------------------------

def _eca_gate_kernel(w_ref, x_ref, gate_ref, acc_ref, wide_ref, *,
                     inv_hw, n_chan, k, hw, tile_hw):
    # w_ref:    (k,) f32 conv weights in SMEM
    # x_ref:    (1, C, tile_hw) input tile (native dtype)
    # gate_ref: (1, C, 1) f32 gate, resident across the spatial grid axis
    # acc_ref:  (1, C, 1) f32 per-channel spatial-sum accumulator
    h = pl.program_id(1)

    @pl.when(h == 0)
    def _init():
        acc_ref[...] = jnp.zeros_like(acc_ref)

    x = x_ref[...]
    if hw % tile_hw != 0:
        # Ragged last tile: lanes past HW are undefined on input -> mask before sum.
        lane = jax.lax.broadcasted_iota(jnp.int32, x.shape, 2)
        x = jnp.where(h * tile_hw + lane < hw, x, jnp.zeros_like(x))
    acc_ref[...] += jnp.sum(x, axis=-1, keepdims=True, dtype=jnp.float32)    # (1,C,1)

    @pl.when(h == pl.num_programs(1) - 1)
    def _finalize():
        mean = acc_ref[...] * inv_hw                 # divide by the TRUE HW
        gate_ref[...] = _channel_conv_sigmoid(w_ref, mean, wide_ref,
                                              n_chan=n_chan, k=k)


def _eca_scale_kernel(x_ref, g_ref, o_ref):
    # x_ref: (1, C, tile_hw) native dtype; g_ref: (1, C, 1) f32; o_ref like x_ref.
    o_ref[...] = (x_ref[...].astype(jnp.float32) * g_ref[...]).astype(o_ref.dtype)


# ----------------------------------- wrapper -----------------------------------

def eca_forward(x, conv_weight, *, fused_slab_bytes=_FUSED_SLAB_BYTES):
    """x: (N, C, H, W); conv_weight: Conv1d(1,1,k,bias=False) weight (flattens to (k,))."""
    N, C, H, W = x.shape
    HW = H * W
    itemsize = jnp.dtype(x.dtype).itemsize
    w = conv_weight.reshape(-1).astype(jnp.float32)
    k = int(w.shape[0])
    if k % 2 != 1:
        # TODO(synk): even k_size (asymmetric PyTorch padding) is not implemented.
        raise NotImplementedError("eca_forward supports odd k_size only.")

    x_flat = x.reshape(N, C, HW)
    inv_hw = 1.0 / HW
    wide = _wide_len(C, k)

    # ---- fused single-pass fast path: whole (C, HW) slab per batch in VMEM ----
    slab_bytes = C * _round_up(HW, _LANES) * itemsize
    if slab_bytes <= fused_slab_bytes:
        out_flat = pl.pallas_call(
            functools.partial(_eca_fused_kernel, inv_hw=inv_hw, n_chan=C, k=k),
            out_shape=jax.ShapeDtypeStruct((N, C, HW), x.dtype),
            grid=(N,),
            in_specs=[
                pl.BlockSpec(memory_space=pltpu.MemorySpace.SMEM),     # conv weights
                pl.BlockSpec((1, C, HW), lambda n: (n, 0, 0)),
            ],
            out_specs=pl.BlockSpec((1, C, HW), lambda n: (n, 0, 0)),
            scratch_shapes=[pltpu.VMEM((1, wide, 1), jnp.float32)],
            compiler_params=pltpu.CompilerParams(
                dimension_semantics=("parallel",),
                vmem_limit_bytes=_VMEM_LIMIT_BYTES),
            cost_estimate=pl.CostEstimate(
                flops=3 * N * C * HW + 2 * k * N * C,
                transcendentals=N * C,
                bytes_accessed=2 * N * C * HW * itemsize),
        )(w, x_flat)
        return out_flat.reshape(N, C, H, W)

    # ---- pass 1: global average pool + k-tap channel conv + sigmoid -> gate ----
    # Pass 1 only streams the input (output is a tiny resident block) so it can
    # use a ~2x larger tile than pass 2, which streams input AND output.
    tile1 = _pick_tile(C, itemsize, HW, n_bufs=2)
    tile2 = _pick_tile(C, itemsize, HW, n_bufs=4)
    n1 = pl.cdiv(HW, tile1)
    n2 = pl.cdiv(HW, tile2)

    gate = pl.pallas_call(
        functools.partial(_eca_gate_kernel, inv_hw=inv_hw, n_chan=C, k=k,
                          hw=HW, tile_hw=tile1),
        out_shape=jax.ShapeDtypeStruct((N, C, 1), jnp.float32),
        grid=(N, n1),
        in_specs=[
            pl.BlockSpec(memory_space=pltpu.MemorySpace.SMEM),         # conv weights
            pl.BlockSpec((1, C, tile1), lambda n, h: (n, 0, h)),       # x tile
        ],
        out_specs=pl.BlockSpec((1, C, 1), lambda n, h: (n, 0, 0)),     # per-batch gate
        scratch_shapes=[pltpu.VMEM((1, C, 1), jnp.float32),            # channel sums
                        pltpu.VMEM((1, wide, 1), jnp.float32)],        # conv scratch
        compiler_params=pltpu.CompilerParams(
            dimension_semantics=("parallel", "arbitrary"),
            vmem_limit_bytes=_VMEM_LIMIT_BYTES),
        cost_estimate=pl.CostEstimate(
            flops=N * C * HW + 2 * k * N * C,
            transcendentals=N * C,
            bytes_accessed=N * C * HW * itemsize + N * C * 4),
    )(w, x_flat)

    # ---- pass 2: out = x * gate, streamed; both grid axes independent ----------
    out_flat = pl.pallas_call(
        _eca_scale_kernel,
        out_shape=jax.ShapeDtypeStruct((N, C, HW), x.dtype),
        grid=(N, n2),
        in_specs=[
            pl.BlockSpec((1, C, tile2), lambda n, h: (n, 0, h)),
            pl.BlockSpec((1, C, 1), lambda n, h: (n, 0, 0)),
        ],
        out_specs=pl.BlockSpec((1, C, tile2), lambda n, h: (n, 0, h)),
        compiler_params=pltpu.CompilerParams(
            dimension_semantics=("parallel", "parallel"),
            vmem_limit_bytes=_VMEM_LIMIT_BYTES),
        cost_estimate=pl.CostEstimate(
            flops=N * C * HW,
            transcendentals=0,
            bytes_accessed=2 * N * C * HW * itemsize + N * C * 4),
    )(x_flat, gate)

    return out_flat.reshape(N, C, H, W)


def eca_reference(x, conv_weight):
    """Pure-JAX reference mirroring the PyTorch forward."""
    xf = x.astype(jnp.float32)
    m = jnp.mean(xf, axis=(2, 3))                                    # (N, C)
    w = conv_weight.reshape(-1).astype(jnp.float32)
    k = w.shape[0]
    pad = (k - 1) // 2
    mp = jnp.pad(m, ((0, 0), (pad, pad)))
    y = sum(w[t] * mp[:, t:t + m.shape[1]] for t in range(k))        # (N, C)
    s = jax.nn.sigmoid(y)[:, :, None, None]
    return (xf * s).astype(x.dtype)


if __name__ == "__main__":
    key = jax.random.PRNGKey(0)
    kx1, kx2, kx3, kw = jax.random.split(key, 4)

    # Conv1d(1, 1, kernel_size=3, bias=False) weight: (1, 1, 3).
    k_size = 3
    bound = k_size ** -0.5
    conv_weight = jax.random.uniform(kw, (1, 1, k_size), jnp.float32, -bound, bound)

    def _check(x, **kwargs):
        out = jax.block_until_ready(eca_forward(x, conv_weight, **kwargs))
        ref = eca_reference(x, conv_weight)
        assert out.shape == x.shape and out.dtype == x.dtype
        assert jnp.allclose(out, ref, atol=1e-5, rtol=1e-5)

    # 1) Required small demo shape (fused single-pass path).
    _check(jax.random.normal(kx1, (2, 4, 16, 16), jnp.float32))
    # 2) Realistic ECA placement: C=128, ragged 7x7 spatial map (fused, HW % 128 != 0).
    _check(jax.random.normal(kx2, (2, 128, 7, 7), jnp.float32))
    # 3) Force the two-pass streaming path: multi-tile accumulation + ragged tail
    #    masking in pass 1 and ragged clamped writes in pass 2.
    _check(jax.random.normal(kx3, (2, 8, 48, 48), jnp.float32), fused_slab_bytes=0)

    print("KERNEL_OK")
</pallas_src>

<mosaic_0001>
module attributes {stable_mosaic.version = 11 : i64} {
  func.func @_eca_fused_kernel(%arg0: i32, %arg1: memref<3xf32, #tpu.memory_space<smem>>, %arg2: memref<1x4x256xf32, #tpu.memory_space<vmem>>, %arg3: memref<1x4x256xf32, #tpu.memory_space<vmem>>, %arg4: memref<1x20x1xf32, #tpu.memory_space<vmem>>) attributes {dimension_semantics = [#tpu.dimension_semantics<parallel>], iteration_bounds = array<i64: 2>, scalar_prefetch = 0 : i64, scratch_operands = 1 : i64, tpu.core_type = #tpu.core_type<tc>, window_params = [{transform_indices = @transform_0, window_bounds = array<i64: 3>}, {transform_indices = @transform_1, window_bounds = array<i64: 1, 4, 256>}, {transform_indices = @transform_2, window_bounds = array<i64: 1, 4, 256>}]} {
    %c0 = arith.constant 0 : index
    %c0_0 = arith.constant 0 : index
    %c0_1 = arith.constant 0 : index
    %0 = vector.load %arg2[%c0, %c0_0, %c0_1] : memref<1x4x256xf32, #tpu.memory_space<vmem>>, vector<1x4x256xf32>
    %cst = arith.constant dense<0.000000e+00> : vector<1x4xf32>
    %1 = vector.multi_reduction <add>, %0, %cst [2] : vector<1x4x256xf32> to vector<1x4xf32>
    %2 = vector.shape_cast %1 : vector<1x4xf32> to vector<1x4x1xf32>
    %cst_2 = arith.constant 3.906250e-03 : f32
    %3 = vector.broadcast %cst_2 : f32 to vector<1x4x1xf32>
    %4 = arith.mulf %2, %3 : vector<1x4x1xf32>
    %cst_3 = arith.constant 0.000000e+00 : f32
    %5 = vector.broadcast %cst_3 : f32 to vector<1x20x1xf32>
    %c0_4 = arith.constant 0 : index
    %c0_5 = arith.constant 0 : index
    %c0_6 = arith.constant 0 : index
    %6 = vector.load %arg4[%c0_4, %c0_5, %c0_6] : memref<1x20x1xf32, #tpu.memory_space<vmem>>, vector<1x20x1xf32>
    tpu.vector_store %arg4[%c0_4, %c0_5, %c0_6], %5 {strides = array<i32>} : memref<1x20x1xf32, #tpu.memory_space<vmem>>, vector<1x20x1xf32>,
    %c0_7 = arith.constant 0 : index
    %c8 = arith.constant 8 : index
    %c0_8 = arith.constant 0 : index
    %7 = vector.load %arg4[%c0_7, %c8, %c0_8] : memref<1x20x1xf32, #tpu.memory_space<vmem>>, vector<1x4x1xf32>
    tpu.vector_store %arg4[%c0_7, %c8, %c0_8], %4 {strides = array<i32>} : memref<1x20x1xf32, #tpu.memory_space<vmem>>, vector<1x4x1xf32>,
    %cst_9 = arith.constant 0.000000e+00 : f32
    %8 = vector.broadcast %cst_9 : f32 to vector<1x4x1xf32>
    %c0_10 = arith.constant 0 : index
    %9 = memref.load %arg1[%c0_10] : memref<3xf32, #tpu.memory_space<smem>>
    %c0_11 = arith.constant 0 : index
    %c7 = arith.constant 7 : index
    %c0_12 = arith.constant 0 : index
    %10 = vector.load %arg4[%c0_11, %c7, %c0_12] : memref<1x20x1xf32, #tpu.memory_space<vmem>>, vector<1x4x1xf32>
    %11 = vector.broadcast %9 : f32 to vector<1x4x1xf32>
    %12 = arith.mulf %11, %10 : vector<1x4x1xf32>
    %13 = arith.addf %8, %12 : vector<1x4x1xf32>
    %c1 = arith.constant 1 : index
    %14 = memref.load %arg1[%c1] : memref<3xf32, #tpu.memory_space<smem>>
    %c0_13 = arith.constant 0 : index
    %c8_14 = arith.constant 8 : index
    %c0_15 = arith.constant 0 : index
    %15 = vector.load %arg4[%c0_13, %c8_14, %c0_15] : memref<1x20x1xf32, #tpu.memory_space<vmem>>, vector<1x4x1xf32>
    %16 = vector.broadcast %14 : f32 to vector<1x4x1xf32>
    %17 = arith.mulf %16, %15 : vector<1x4x1xf32>
    %18 = arith.addf %13, %17 : vector<1x4x1xf32>
    %c2 = arith.constant 2 : index
    %19 = memref.load %arg1[%c2] : memref<3xf32, #tpu.memory_space<smem>>
    %c0_16 = arith.constant 0 : index
    %c9 = arith.constant 9 : index
    %c0_17 = arith.constant 0 : index
    %20 = vector.load %arg4[%c0_16, %c9, %c0_17] : memref<1x20x1xf32, #tpu.memory_space<vmem>>, vector<1x4x1xf32>
    %21 = vector.broadcast %19 : f32 to vector<1x4x1xf32>
    %22 = arith.mulf %21, %20 : vector<1x4x1xf32>
    %23 = arith.addf %18, %22 : vector<1x4x1xf32>
    %24 = arith.negf %23 : vector<1x4x1xf32>
    %25 = math.exp %24 : vector<1x4x1xf32>
    %cst_18 = arith.constant 1.000000e+00 : f32
    %26 = vector.broadcast %cst_18 : f32 to vector<1x4x1xf32>
    %27 = arith.addf %26, %25 : vector<1x4x1xf32>
    %28 = arith.divf %26, %27 : vector<1x4x1xf32>
    %29 = vector.broadcast %28 : vector<1x4x1xf32> to vector<1x4x256xf32>
    %30 = arith.mulf %0, %29 : vector<1x4x256xf32>
    %c0_19 = arith.constant 0 : index
    %c0_20 = arith.constant 0 : index
    %c0_21 = arith.constant 0 : index
    %31 = vector.load %arg3[%c0_19, %c0_20, %c0_21] : memref<1x4x256xf32, #tpu.memory_space<vmem>>, vector<1x4x256xf32>
    tpu.vector_store %arg3[%c0_19, %c0_20, %c0_21], %30 {strides = array<i32>} : memref<1x4x256xf32, #tpu.memory_space<vmem>>, vector<1x4x256xf32>,
    return
  }
  func.func @transform_0(%arg0: i32) -> i32 {
    %c0_i32 = arith.constant 0 : i32
    %c0_i32_0 = arith.constant 0 : i32
    return %c0_i32 : i32
  }
  func.func @transform_1(%arg0: i32) -> (i32, i32, i32) {
    %c0_i32 = arith.constant 0 : i32
    %c0_i32_0 = arith.constant 0 : i32
    %c0_i32_1 = arith.constant 0 : i32
    return %arg0, %c0_i32, %c0_i32_0 : i32, i32, i32
  }
  func.func @transform_2(%arg0: i32) -> (i32, i32, i32) {
    %c0_i32 = arith.constant 0 : i32
    %c0_i32_0 = arith.constant 0 : i32
    %c0_i32_1 = arith.constant 0 : i32
    return %arg0, %c0_i32, %c0_i32_0 : i32, i32, i32
  }
}

</mosaic_0001>

<llo_original>
// kernel: tpu_custom_call.1
$region0: #{tpu_custom_call.1}
  #allocation0 [shape = 'u32[]', space=smem, size = 0x4, offset = 0x4, fixed_abs, tag = 'smem constant byte address 0x4 - core index']
  #allocation1 [shape = 'u32[144,128]{1,0:T(1,128)}', space=vmem, size = 0x12000, scoped, tag = 'internal scratch']
  #allocation2 [shape = 'f32[1,20,1]{2,1,0:T(8,128)}', space=vmem, size = 0x3000, scoped, tag = 'scratch operand']
  %s0 = inlined_call_operand.hbm [shape: f32[3], index: 0, kind: input, shape index: {}]
  %s1 = inlined_call_operand.hbm [shape: f32[2,4,256], index: 1, kind: input, shape index: {}]
  %s2 = inlined_call_operand.hbm [shape: f32[2,4,256], index: 2, kind: output, shape index: {}]
  %s3 = sld [smem:[#allocation0]]
  $region49: #{tpu_custom_call.1} parent=0
    _
  %s5 = ssub.s32 1, %s3
  %s6 = scalar_select 0, %s5, %s3
  $region1: #{tpu_custom_call.1} parent=0
    #allocation3 [shape = 'u8[512]{0}', space=smem, size = 0x200, scoped, tag = 'input window, operand 0, single buffered']
    #allocation4 [shape = 's32[2]{0}', space=sflag, size = 0x8, scoped, tag = 'scoped memory for tpu_custom_call.1']
    #allocation5 [shape = 's32[2]{0}', space=sflag, size = 0x8, scoped, tag = 'scoped memory for tpu_custom_call.1']
    #allocation6 [shape = 's32[2]{0}', space=sflag, size = 0x8, scoped, tag = 'scoped memory for tpu_custom_call.1']
    #allocation7 [shape = 'u8[8192]{0}', space=vmem, size = 0x2000, scoped, tag = 'input window, operand 1']
    #allocation8 [shape = 'u8[8192]{0}', space=vmem, size = 0x2000, scoped, tag = 'output window, operand 0']
    %7 = vsyncpa [#allocation6], 0
    %8 = vsyncpa [#allocation4], 0
    %s9 = scalar_lea.sflag [#allocation4], 1
    %10 = vsyncpa %s9, 0
    %11 = vsyncpa [#allocation5], 0
    %s12 = scalar_lea.sflag [#allocation5], 1
    %13 = vsyncpa %s12, 0
    loop: start=0, step=1, limit=4
    $region2: #{tpu_custom_call.1} parent=1 // loop_pre_header
      _
    $region3: #{tpu_custom_call.1} parent=1 // loop_header
      %s15 = sphi 0, %s19
      %p16 = scmp.ge.s32.totalorder %s15, 4
      %s23 = sphi 0, %s23
      %s25 = sphi 0, %s23
      %s26 = sphi 0, %s25
      %s40 = sphi 0, %s26
      %s46 = sphi 0, %s48
      %s49 = sphi 0, %s46
      %s50 = sphi 0, %s49
      %s66 = sphi 0, %s50
      %s72 = sphi 0, %s74
      %s75 = sphi 0, %s72
      %s76 = sphi 0, %s75
      %s92 = sphi 0, %s76
    $region4: #{tpu_custom_call.1} parent=1 // loop_header_branch
      %18 = sbr.rel (%p16) target = $region8
    $region5: #{tpu_custom_call.1} parent=1 // loop_body
      %s20 = ssub.s32 %s15, 1
      %s21 = ssub.s32 %s15, 2
      %s22 = sadd.s32 %s15, 1
      %s24 = sadd.s32 %s23, 1
      %p27 = scmp.eq.s32.totalorder %s15, 1
      %p28 = scmp.ne.s32.totalorder %s23, %s25
      %p29 = scmp.eq.s32.totalorder %s15, 0
      %p30 = por %p28, %p29
      %p31 = scmp.ne.s32.totalorder %s23, %s25
      %p32 = scmp.eq.s32.totalorder %s20, 1
      %p33 = por %p31, %p32
      %p34 = scmp.ne.s32.totalorder %s25, %s26
      %p35 = scmp.eq.s32.totalorder %s20, 0
      %p36 = por %p34, %p35
      %p37 = scmp.ne.s32.totalorder %s25, %s26
      %p38 = scmp.eq.s32.totalorder %s21, 1
      %p39 = por %p37, %p38
      %p41 = scmp.ne.s32.totalorder %s26, %s40
      %p42 = scmp.eq.s32.totalorder %s21, 0
      %p43 = por %p41, %p42
      %s44 = ssub.s32 %s15, %s22
      %p45 = scmp.eq.s32.totalorder %s44, 0
      %s47 = sadd.s32 %s46, 1
      %s48 = scalar_select %p45, %s46, %s47
      %p51 = pneg %p45
      %p52 = scmp.eq.s32.totalorder %s15, 1
      %p53 = por %p51, %p52
      %p54 = scmp.ne.s32.totalorder %s46, %s49
      %p55 = scmp.eq.s32.totalorder %s15, 0
      %p56 = por %p54, %p55
      %p57 = scmp.ne.s32.totalorder %s46, %s49
      %p58 = scmp.eq.s32.totalorder %s20, 1
      %p59 = por %p57, %p58
      %p60 = scmp.ne.s32.totalorder %s49, %s50
      %p61 = scmp.eq.s32.totalorder %s20, 0
      %p62 = por %p60, %p61
      %p63 = scmp.ne.s32.totalorder %s49, %s50
      %p64 = scmp.eq.s32.totalorder %s21, 1
      %p65 = por %p63, %p64
      %p67 = scmp.ne.s32.totalorder %s50, %s66
      %p68 = scmp.eq.s32.totalorder %s21, 0
      %p69 = por %p67, %p68
      %s70 = ssub.s32 %s15, %s22
      %p71 = scmp.eq.s32.totalorder %s70, 0
      %s73 = sadd.s32 %s72, 1
      %s74 = scalar_select %p71, %s72, %s73
      %p77 = pneg %p71
      %p78 = scmp.eq.s32.totalorder %s15, 1
      %p79 = por %p77, %p78
      %p80 = scmp.ne.s32.totalorder %s72, %s75
      %p81 = scmp.eq.s32.totalorder %s15, 0
      %p82 = por %p80, %p81
      %p83 = scmp.ne.s32.totalorder %s72, %s75
      %p84 = scmp.eq.s32.totalorder %s20, 1
      %p85 = por %p83, %p84
      %p86 = scmp.ne.s32.totalorder %s75, %s76
      %p87 = scmp.eq.s32.totalorder %s20, 0
      %p88 = por %p86, %p87
      %p89 = scmp.ne.s32.totalorder %s75, %s76
      %p90 = scmp.eq.s32.totalorder %s21, 1
      %p91 = por %p89, %p90
      %p93 = scmp.ne.s32.totalorder %s76, %s92
      %p94 = scmp.eq.s32.totalorder %s21, 0
      %p95 = por %p93, %p94
      %p96 = scmp.le.s32.totalorder 1, %s15
      %p97 = scmp.lt.s32.totalorder %s15, 3
      %p98 = pnand %p96, %p97
      %p99 = pneg %p98
      // Predicated region
      $region9: #{tpu_custom_call.1} parent=5 // pred_check
        _
      $region10: #{tpu_custom_call.1} parent=5 // pred_check_branch
        %101 = sbr.rel (%p98) target = $region12
      $region11: #{tpu_custom_call.1} parent=5 // pred_region
        %s102 = ssub.s32 %s15, 1
        // Predicated region
        $region13: #{tpu_custom_call.1} parent=11 // pred_check
          %p103 = pneg %p36
        $region14: #{tpu_custom_call.1} parent=11 // pred_check_branch
          %105 = sbr.rel (%p103) target = $region16
        $region15: #{tpu_custom_call.1} parent=11 // pred_region
          %s107 = ssub.s32 16, 16
          %108 = vsyncadd [#allocation6], %s107
          %111 = dma.hbm_to_smem %s0, 16, [#allocation3], [#allocation6]
        $region16: #{tpu_custom_call.1} parent=11 // pred_fallthru
          _
      $region12: #{tpu_custom_call.1} parent=5 // pred_fallthru
        _
      %p112 = scmp.lt.s32.totalorder %s15, 2
      // Predicated region
      $region17: #{tpu_custom_call.1} parent=5 // pred_check
        %p113 = pneg %p112
      $region18: #{tpu_custom_call.1} parent=5 // pred_check_branch
        %115 = sbr.rel (%p113) target = $region20
      $region19: #{tpu_custom_call.1} parent=5 // pred_region
        // Predicated region
        $region21: #{tpu_custom_call.1} parent=19 // pred_check
          %p116 = pneg %p56
        $region22: #{tpu_custom_call.1} parent=19 // pred_check_branch
          %118 = sbr.rel (%p116) target = $region24
        $region23: #{tpu_custom_call.1} parent=19 // pred_region
          %s119 = sand.u32 %s46, 1
          %s120 = scalar_lea.sflag [#allocation4], %s119
          %s121 = sand.u32 %s46, 1
          %s122 = smul.addr %s121, 8
          %s123 = scalar_lea.vmem [#allocation7], %s122
          %s125 = ssub.s32 128, 128
          %126 = vsyncadd %s120, %s125
          %s127 = smul.addr %s15, 2
          %s128 = smul.addr %s127, 64
          %s129 = scalar_lea.hbm %s1, %s128
          %s131 = sshll.u32 %s123, 4
          %s132 = int_to_ptr.vmem [resolvable:$true] %s131
          %134 = dma.hbm_to_vmem [thread:$0]  %s129, 128, %s132, %s120
        $region24: #{tpu_custom_call.1} parent=19 // pred_fallthru
          _
      $region20: #{tpu_custom_call.1} parent=5 // pred_fallthru
        _
      %p135 = scmp.le.s32.totalorder 1, %s15
      %p136 = scmp.lt.s32.totalorder %s15, 3
      %p137 = pnand %p135, %p136
      %p138 = pneg %p137
      // Predicated region
      $region25: #{tpu_custom_call.1} parent=5 // pred_check
        _
      $region26: #{tpu_custom_call.1} parent=5 // pred_check_branch
        %140 = sbr.rel (%p137) target = $region28
      $region27: #{tpu_custom_call.1} parent=5 // pred_region
        %s141 = ssub.s32 %s15, 1
        // Predicated region
        $region29: #{tpu_custom_call.1} parent=27 // pred_check
          %p142 = pneg %p36
        $region30: #{tpu_custom_call.1} parent=27 // pred_check_branch
          %144 = sbr.rel (%p142) target = $region32
        $region31: #{tpu_custom_call.1} parent=27 // pred_region
          %145 = dma.done [#allocation6], 16
        $region32: #{tpu_custom_call.1} parent=27 // pred_fallthru
          _
        %s146 = sand.u32 %s49, 1
        %s147 = scalar_lea.sflag [#allocation4], %s146
        %s148 = sand.u32 %s49, 1
        %s149 = smul.addr %s148, 8
        %s150 = scalar_lea.vmem [#allocation7], %s149
        // Predicated region
        $region33: #{tpu_custom_call.1} parent=27 // pred_check
          %p151 = pneg %p62
        $region34: #{tpu_custom_call.1} parent=27 // pred_check_branch
          %153 = sbr.rel (%p151) target = $region36
        $region35: #{tpu_custom_call.1} parent=27 // pred_region
          %154 = dma.done %s147, 128
        $region36: #{tpu_custom_call.1} parent=27 // pred_fallthru
          _
        %155 = sfence
        %p156 = pneg %p36
        %p157 = pneg %p33
        %s158 = sand.u32 %s49, 1
        %s159 = scalar_lea.sflag [#allocation4], %s158
        %s160 = sand.u32 %s49, 1
        %s161 = smul.addr %s160, 8
        %s162 = scalar_lea.vmem [#allocation7], %s161
        %p163 = pneg %p62
        %p164 = pneg %p59
        %p165 = pneg %p88
        %p166 = pneg %p85
        %s167 = sand.u32 %s75, 1
        %s168 = scalar_lea.sflag [#allocation5], %s167
        %s169 = sand.u32 %s75, 1
        %s170 = smul.addr %s169, 8
        %s171 = scalar_lea.vmem [#allocation8], %s170
        %v172 = vld [vmem:[%s150] sm:$0xff]
        %v174 = vcombine.high %v172, %v172
        %vm176 = vcmask 1043456
        %v177 = vsel %vm176, %v172, 0.0
        %v178 = vsel %vm176, %v174, 0.0
        %v179 = vadd.f32 %v177, %v178
        %180 = vadd.xlane.f32.xlu0 %v179
        %v181 = vpop.xlane.xlu0 %180
        %v182 = vmul.f32 %v181, 0.00390625
        %vm183 = vcmask 7168
        %184 = vst.msk [vmem:[#allocation2] sm:$0xff] %vm183, 0.0
        %185 = vst.msk [vmem:[#allocation2 + $0x8] sm:$0xff] %vm183, 0.0
        %vm186 = vcmask 3072
        %187 = vst.msk [vmem:[#allocation2 + $0x10] sm:$0xf] %vm186, 0.0
        %188 = vst.msk [vmem:[#allocation2 + $0x8] sm:$0xf] %vm186, %v182
        %s189 = sld [smem:[#allocation3]]
        %v190 = vld [vmem:[#allocation2 + $0x7] sm:$0xf]
        %v191 = vstv %s189
        %v192 = vmul.f32 %v191, %v190
        %v193 = vadd.f32 %v192, 0.0
        %s194 = sld [smem:[#allocation3 + $0x1]]
        %v195 = vld [vmem:[#allocation2 + $0x8] sm:$0xf]
        %v196 = vstv %s194
        %v197 = vmul.f32 %v196, %v195
        %v198 = vadd.f32 %v193, %v197
        %s199 = sld [smem:[#allocation3 + $0x2]]
        %v200 = vld [vmem:[#allocation2 + $0x9] sm:$0xf]
        %v201 = vstv %s199
        %v202 = vmul.f32 %v201, %v200
        %v203 = vadd.f32 %v198, %v202
        %v204 = vxor.u32 %v203, 2147483648
        %v205 = vmul.f32 %v204, 1.442695
        %v206 = vpow.pop %v205
        %v207 = vadd.f32 %v206, 1.0
        %v208 = vrcp.pop %v207
        %v209 = vmul.f32 1.0, %v208
        %211 = vset.pattern.permute.xlu0 0
        %212 = vperm.xlu0 %211, %v209
        %v213 = vpop.permute.xlu0 %212
        %v215 = vunpack.c.l.s4 839922192
        %v216 = vunpack.c.0.s8 %v215
        %v217 = vlaneseq
        %v218 = vshrl.u32 %v217, 7
        %v219 = vsub.s32 %v216, %v218
        %v220 = vrot.slane %v213, %v219
        %v222 = vmul.f32 %v172, %v220
        %223 = vst [vmem:[%s171] sm:$0xff] %v222
        %s224 = sand.u32 %s75, 1
        %s225 = scalar_lea.sflag [#allocation5], %s224
        %s226 = sand.u32 %s75, 1
        %s227 = smul.addr %s226, 8
        %s228 = scalar_lea.vmem [#allocation8], %s227
        // Predicated region
        $region37: #{tpu_custom_call.1} parent=27 // pred_check
          %p229 = pneg %p85
        $region38: #{tpu_custom_call.1} parent=27 // pred_check_branch
          %231 = sbr.rel (%p229) target = $region40
        $region39: #{tpu_custom_call.1} parent=27 // pred_region
          %s233 = ssub.s32 128, 128
          %234 = vsyncadd %s225, %s233
          %s235 = smul.addr %s20, 2
          %s236 = smul.addr %s235, 64
          %s237 = scalar_lea.hbm %s2, %s236
          %s239 = sshll.u32 %s228, 4
          %s240 = int_to_ptr.vmem [resolvable:$true] %s239
          %242 = dma.vmem_to_hbm [thread:$0]  %s240, 128, %s237, %s225
        $region40: #{tpu_custom_call.1} parent=27 // pred_fallthru
          _
      $region28: #{tpu_custom_call.1} parent=5 // pred_fallthru
        _
      %p243 = scmp.le.s32.totalorder 2, %s15
      // Predicated region
      $region41: #{tpu_custom_call.1} parent=5 // pred_check
        %p244 = pneg %p243
      $region42: #{tpu_custom_call.1} parent=5 // pred_check_branch
        %246 = sbr.rel (%p244) target = $region44
      $region43: #{tpu_custom_call.1} parent=5 // pred_region
        %s247 = ssub.s32 %s15, 2
        // Predicated region
        $region45: #{tpu_custom_call.1} parent=43 // pred_check
          %p248 = pneg %p91
        $region46: #{tpu_custom_call.1} parent=43 // pred_check_branch
          %250 = sbr.rel (%p248) target = $region48
        $region47: #{tpu_custom_call.1} parent=43 // pred_region
          %s251 = sand.u32 %s76, 1
          %s252 = scalar_lea.sflag [#allocation5], %s251
          %s253 = sand.u32 %s76, 1
          %s254 = smul.addr %s253, 8
          %s255 = scalar_lea.vmem [#allocation8], %s254
          %256 = dma.done %s252, 128
        $region48: #{tpu_custom_call.1} parent=43 // pred_fallthru
          _
      $region44: #{tpu_custom_call.1} parent=5 // pred_fallthru
        _
    $region6: #{tpu_custom_call.1} parent=1 // loop_footer
      %s19 = sadd.s32 1, %s15
    $region7: #{tpu_custom_call.1} parent=1 // loop_footer_branch
      %14 = sbr.rel target = $region3
    $region8: #{tpu_custom_call.1} parent=1 // loop_exit
      _
    %257 = vsyncpa [#allocation4], 1
    %s258 = scalar_lea.sflag [#allocation4], 1
    %259 = vsyncpa %s258, 1
    %260 = vsyncpa [#allocation5], 1
    %s261 = scalar_lea.sflag [#allocation5], 1
    %262 = vsyncpa %s261, 1
    %263 = vsyncpa [#allocation6], 1
    %s264 = scalar_lea.sflag [#allocation6], 1
    %265 = vsyncpa %s264, 1

</llo_original>
